<compile_context>
chip_gen: v5e
topology: v5e:2x2
jax: 0.10.0
libtpu: 0.0.40
codegen_flags: <defaults>
</compile_context>

<pallas_src>
import functools

import jax
import jax.numpy as jnp
from jax import lax
from jax.experimental import pallas as pl
from jax.experimental.pallas import tpu as pltpu


def _focal_loss_kernel(x_ref, tgt_ref, out_ref, acc_ref, *,
                       gamma, n_valid, tile_n, inv_n):
    i = pl.program_id(0)

    @pl.when(i == 0)
    def _():
        acc_ref[...] = jnp.zeros_like(acc_ref)

    x = x_ref[...].astype(jnp.float32)                        # (TN, C)
    tn, c = x.shape

    # log_softmax pieces; the single full-tile exp feeds the denominator only.
    m = jnp.max(x, axis=-1, keepdims=True)                    # (TN, 1)
    shifted = x - m                                           # (TN, C)
    e = jnp.exp(shifted)                                      # (TN, C)
    s = jnp.sum(e, axis=-1, keepdims=True)                    # (TN, 1)

    # Gather the target column of `shifted` via a one-hot lane mask.
    col = lax.broadcasted_iota(jnp.int32, (tn, c), 1)
    mask = col == tgt_ref[...]                                # (TN, C); tgt_ref is (TN, 1)
    shifted_t = jnp.sum(jnp.where(mask, shifted, 0.0), axis=-1, keepdims=True)

    logp_t = shifted_t - jnp.log(s)                           # log p_target (exact)
    p_t = jnp.exp(logp_t)                                     # (TN, 1) EUP exp, cheap

    one_minus_p = 1.0 - p_t
    if gamma == 2.0:
        modul = one_minus_p * one_minus_p                     # explicit square: 1 VPU mul
    elif gamma == 1.0:
        modul = one_minus_p
    elif gamma == 0.0:
        modul = jnp.ones_like(one_minus_p)
    else:
        modul = one_minus_p ** jnp.float32(gamma)

    loss = -(modul * logp_t)                                  # (TN, 1) per-row focal NLL

    # Mask out rows that are padding (global row index >= N).
    row = i * tile_n + lax.broadcasted_iota(jnp.int32, (tn, 1), 0)
    loss = jnp.where(row < n_valid, loss, 0.0)

    acc_ref[...] += jnp.sum(loss, keepdims=True)              # (1, 1) accumulator

    @pl.when(i == pl.num_programs(0) - 1)
    def _():
        # reduction='mean' with weight=None: sum over the N real rows / N.
        out_ref[...] = acc_ref[...] * jnp.float32(inv_n)


def focal_loss(logits, targets, *, gamma=2.0, tile_n=None):
    """logits: (N, C) float; targets: (N,) int. Returns scalar mean focal loss.

    Matches FocalLoss(weight=None, gamma=gamma, reduction='mean').forward.
    """
    # TODO(synk): F.nll_loss's per-class `weight` and ignore_index=-100 are not
    # implemented (the reference module uses weight=None).
    n, c = logits.shape
    itemsize = jnp.dtype(logits.dtype).itemsize

    if tile_n is None:
        # Biggest row-tile such that one logits block stays under ~4 MiB
        # (Pallas double-buffers => ~8 MiB of VMEM for the logits stream),
        # capped at 2048 rows; 8-row (sublane) aligned.
        budget_bytes = 4 * 1024 * 1024
        tile_n = budget_bytes // max(1, c * itemsize)
        tile_n = min(2048, tile_n)
    # Don't make tiles larger than the (8-row-rounded) problem, keep 8-aligned.
    n_rounded8 = ((n + 7) // 8) * 8
    tile_n = min(tile_n, n_rounded8)
    tile_n = max(8, (tile_n // 8) * 8)

    n_pad = ((n + tile_n - 1) // tile_n) * tile_n
    if n_pad != n:
        logits = jnp.pad(logits, ((0, n_pad - n), (0, 0)))
        targets = jnp.pad(targets, (0, n_pad - n))            # pad with class 0 (masked off)
    tgt2d = targets.astype(jnp.int32).reshape(n_pad, 1)

    out = pl.pallas_call(
        functools.partial(_focal_loss_kernel, gamma=gamma, n_valid=n,
                          tile_n=tile_n, inv_n=1.0 / n),
        out_shape=jax.ShapeDtypeStruct((1, 1), jnp.float32),
        grid_spec=pltpu.PrefetchScalarGridSpec(
            num_scalar_prefetch=0,
            grid=(n_pad // tile_n,),
            in_specs=[
                pl.BlockSpec((tile_n, c), lambda i: (i, 0)),
                pl.BlockSpec((tile_n, 1), lambda i: (i, 0)),
            ],
            out_specs=pl.BlockSpec((1, 1), lambda i: (0, 0)),
            scratch_shapes=[pltpu.VMEM((1, 1), jnp.float32)],
        ),
        compiler_params=pltpu.CompilerParams(
            dimension_semantics=("arbitrary",),   # accumulating output across the grid
            vmem_limit_bytes=32 * 1024 * 1024,
        ),
    )(logits, tgt2d)

    return out[0, 0]


def focal_loss_ref(logits, targets, gamma=2.0):
    # pure-JAX reference of the PyTorch forward
    log_prob = jax.nn.log_softmax(logits.astype(jnp.float32), axis=-1)
    prob = jnp.exp(log_prob)
    mod = (1.0 - prob) ** gamma * log_prob
    picked = jnp.take_along_axis(mod, targets[:, None].astype(jnp.int32), axis=-1)[:, 0]
    return -jnp.mean(picked)


if __name__ == "__main__":
    key = jax.random.PRNGKey(0)
    k1, k2, k3, k4 = jax.random.split(key, 4)

    # Case 1: shapes consistent with the module's use (batch of logits over classes).
    N, C = 16, 32
    logits = jax.random.normal(k1, (N, C), dtype=jnp.float32)
    targets = jax.random.randint(k2, (N,), 0, C, dtype=jnp.int32)
    out = focal_loss(logits, targets)
    jax.block_until_ready(out)
    ref = focal_loss_ref(logits, targets)
    assert jnp.allclose(out, ref, rtol=1e-5, atol=1e-5), (out, ref)

    # Case 2: ragged N (exercises the padding path / in-kernel row masking).
    N2, C2 = 37, 48
    logits2 = jax.random.normal(k3, (N2, C2), dtype=jnp.float32)
    targets2 = jax.random.randint(k4, (N2,), 0, C2, dtype=jnp.int32)
    out2 = focal_loss(logits2, targets2)
    jax.block_until_ready(out2)
    ref2 = focal_loss_ref(logits2, targets2)
    assert jnp.allclose(out2, ref2, rtol=1e-5, atol=1e-5), (out2, ref2)

    print("KERNEL_OK")
</pallas_src>

<mosaic_0001>
module attributes {stable_mosaic.version = 11 : i64} {
  func.func @_focal_loss_kernel(%arg0: i32, %arg1: memref<16x32xf32, #tpu.memory_space<vmem>>, %arg2: memref<16x1xi32, #tpu.memory_space<vmem>>, %arg3: memref<1x1xf32, #tpu.memory_space<vmem>>, %arg4: memref<1x1xf32, #tpu.memory_space<vmem>>) attributes {dimension_semantics = [#tpu.dimension_semantics<arbitrary>], iteration_bounds = array<i64: 1>, scalar_prefetch = 0 : i64, scratch_operands = 1 : i64, tpu.core_type = #tpu.core_type<tc>, window_params = [{transform_indices = @transform_0, window_bounds = array<i64: 16, 32>}, {transform_indices = @transform_1, window_bounds = array<i64: 16, 1>}, {pipeline_mode = #tpu.pipeline_mode<synchronous>, transform_indices = @transform_2, window_bounds = array<i64: 1, 1>}]} {
    %c0_i32 = arith.constant 0 : i32
    %0 = arith.cmpi eq, %arg0, %c0_i32 : i32
    %1 = arith.extui %0 : i1 to i32
    %c0_i32_0 = arith.constant 0 : i32
    %2 = arith.cmpi ne, %1, %c0_i32_0 : i32
    scf.if %2 {
      %cst_18 = arith.constant 0.000000e+00 : f32
      %47 = vector.broadcast %cst_18 : f32 to vector<1x1xf32>
      %c0_19 = arith.constant 0 : index
      %c0_20 = arith.constant 0 : index
      %48 = vector.load %arg4[%c0_19, %c0_20] : memref<1x1xf32, #tpu.memory_space<vmem>>, vector<1x1xf32>
      tpu.vector_store %arg4[%c0_19, %c0_20], %47 {strides = array<i32>} : memref<1x1xf32, #tpu.memory_space<vmem>>, vector<1x1xf32>,
    } else {
    }
    %c0 = arith.constant 0 : index
    %c0_1 = arith.constant 0 : index
    %3 = vector.load %arg1[%c0, %c0_1] : memref<16x32xf32, #tpu.memory_space<vmem>>, vector<16x32xf32>
    %cst = arith.constant dense<0xFF800000> : vector<16xf32>
    %4 = vector.multi_reduction <maximumf>, %3, %cst [1] : vector<16x32xf32> to vector<16xf32>
    %5 = vector.shape_cast %4 : vector<16xf32> to vector<16x1xf32>
    %6 = vector.broadcast %5 : vector<16x1xf32> to vector<16x32xf32>
    %7 = arith.subf %3, %6 : vector<16x32xf32>
    %8 = math.exp %7 : vector<16x32xf32>
    %cst_2 = arith.constant dense<0.000000e+00> : vector<16xf32>
    %9 = vector.multi_reduction <add>, %8, %cst_2 [1] : vector<16x32xf32> to vector<16xf32>
    %10 = vector.shape_cast %9 : vector<16xf32> to vector<16x1xf32>
    %11 = tpu.iota {dimensions = array<i32: 1>} : vector<16x32xi32>
    %c0_3 = arith.constant 0 : index
    %c0_4 = arith.constant 0 : index
    %12 = vector.load %arg2[%c0_3, %c0_4] : memref<16x1xi32, #tpu.memory_space<vmem>>, vector<16x1xi32>
    %13 = vector.broadcast %12 : vector<16x1xi32> to vector<16x32xi32>
    %14 = arith.cmpi eq, %11, %13 : vector<16x32xi32>
    %cst_5 = arith.constant 0.000000e+00 : f32
    %15 = vector.broadcast %cst_5 : f32 to vector<16x32xf32>
    %16 = arith.select %14, %7, %15 : vector<16x32xi1>, vector<16x32xf32>
    %cst_6 = arith.constant dense<0.000000e+00> : vector<16xf32>
    %17 = vector.multi_reduction <add>, %16, %cst_6 [1] : vector<16x32xf32> to vector<16xf32>
    %18 = vector.shape_cast %17 : vector<16xf32> to vector<16x1xf32>
    %19 = math.log %10 : vector<16x1xf32>
    %20 = arith.subf %18, %19 : vector<16x1xf32>
    %21 = math.exp %20 : vector<16x1xf32>
    %cst_7 = arith.constant 1.000000e+00 : f32
    %22 = vector.broadcast %cst_7 : f32 to vector<16x1xf32>
    %23 = arith.subf %22, %21 : vector<16x1xf32>
    %24 = arith.mulf %23, %23 : vector<16x1xf32>
    %25 = arith.mulf %24, %20 : vector<16x1xf32>
    %cst_8 = arith.constant 0.000000e+00 : f32
    %26 = vector.broadcast %cst_8 : f32 to vector<16x1xf32>
    %27 = arith.subf %26, %25 : vector<16x1xf32>
    %c16_i32 = arith.constant 16 : i32
    %28 = arith.muli %arg0, %c16_i32 : i32
    %29 = tpu.iota {dimensions = array<i32: 0>} : vector<16x1xi32>
    %30 = vector.broadcast %28 : i32 to vector<16x1xi32>
    %31 = arith.addi %30, %29 : vector<16x1xi32>
    %c16_i32_9 = arith.constant 16 : i32
    %32 = vector.broadcast %c16_i32_9 : i32 to vector<16x1xi32>
    %33 = arith.cmpi slt, %31, %32 : vector<16x1xi32>
    %cst_10 = arith.constant 0.000000e+00 : f32
    %34 = vector.broadcast %cst_10 : f32 to vector<16x1xf32>
    %35 = arith.select %33, %27, %34 : vector<16x1xi1>, vector<16x1xf32>
    %c0_11 = arith.constant 0 : index
    %c0_12 = arith.constant 0 : index
    %36 = vector.load %arg4[%c0_11, %c0_12] : memref<1x1xf32, #tpu.memory_space<vmem>>, vector<1x1xf32>
    %37 = vector.shape_cast %35 : vector<16x1xf32> to vector<1x16x1xf32>
    %cst_13 = arith.constant dense<0.000000e+00> : vector<1xf32>
    %38 = vector.multi_reduction <add>, %37, %cst_13 [1, 2] : vector<1x16x1xf32> to vector<1xf32>
    %39 = vector.shape_cast %38 : vector<1xf32> to vector<1x1x1xf32>
    %40 = vector.extract %39[0, 0, 0] : f32 from vector<1x1x1xf32>
    %41 = vector.broadcast %40 : f32 to vector<1x1xf32>
    %42 = arith.addf %36, %41 : vector<1x1xf32>
    %c0_14 = arith.constant 0 : index
    %c0_15 = arith.constant 0 : index
    %43 = vector.load %arg4[%c0_14, %c0_15] : memref<1x1xf32, #tpu.memory_space<vmem>>, vector<1x1xf32>
    tpu.vector_store %arg4[%c0_14, %c0_15], %42 {strides = array<i32>} : memref<1x1xf32, #tpu.memory_space<vmem>>, vector<1x1xf32>,
    %c0_i32_16 = arith.constant 0 : i32
    %44 = arith.cmpi eq, %arg0, %c0_i32_16 : i32
    %45 = arith.extui %44 : i1 to i32
    %c0_i32_17 = arith.constant 0 : i32
    %46 = arith.cmpi ne, %45, %c0_i32_17 : i32
    scf.if %46 {
      %c0_18 = arith.constant 0 : index
      %c0_19 = arith.constant 0 : index
      %47 = vector.load %arg4[%c0_18, %c0_19] : memref<1x1xf32, #tpu.memory_space<vmem>>, vector<1x1xf32>
      %cst_20 = arith.constant 6.250000e-02 : f32
      %48 = vector.broadcast %cst_20 : f32 to vector<1x1xf32>
      %49 = arith.mulf %47, %48 : vector<1x1xf32>
      %c0_21 = arith.constant 0 : index
      %c0_22 = arith.constant 0 : index
      %50 = vector.load %arg3[%c0_21, %c0_22] : memref<1x1xf32, #tpu.memory_space<vmem>>, vector<1x1xf32>
      tpu.vector_store %arg3[%c0_21, %c0_22], %49 {strides = array<i32>} : memref<1x1xf32, #tpu.memory_space<vmem>>, vector<1x1xf32>,
    } else {
    }
    return
  }
  func.func @transform_0(%arg0: i32) -> (i32, i32) {
    %c0_i32 = arith.constant 0 : i32
    %c0_i32_0 = arith.constant 0 : i32
    return %arg0, %c0_i32 : i32, i32
  }
  func.func @transform_1(%arg0: i32) -> (i32, i32) {
    %c0_i32 = arith.constant 0 : i32
    %c0_i32_0 = arith.constant 0 : i32
    return %arg0, %c0_i32 : i32, i32
  }
  func.func @transform_2(%arg0: i32) -> (i32, i32) {
    %c0_i32 = arith.constant 0 : i32
    %c0_i32_0 = arith.constant 0 : i32
    %c0_i32_1 = arith.constant 0 : i32
    return %c0_i32, %c0_i32_0 : i32, i32
  }
}

</mosaic_0001>

<llo_original>
// kernel: tpu_custom_call.1
$region0: #{tpu_custom_call.1}
  #allocation0 [shape = 'u32[]', space=smem, size = 0x4, offset = 0x4, fixed_abs, tag = 'smem constant byte address 0x4 - core index']
  #allocation1 [shape = 'u32[72,128]{1,0:T(1,128)}', space=vmem, size = 0x9000, scoped, tag = 'internal scratch']
  #allocation2 [shape = 'f32[1,1]{1,0:T(1,128)}', space=vmem, size = 0x200, scoped, tag = 'scratch operand']
  %s0 = inlined_call_operand.vmem [shape: f32[16,32], index: 0, kind: input, shape index: {}]
  %s1 = inlined_call_operand.vmem [shape: s32[16,1], index: 1, kind: input, shape index: {}]
  %s2 = inlined_call_operand.hbm [shape: f32[1,1], index: 2, kind: output, shape index: {}]
  %s3 = sld [smem:[#allocation0]]
  $region26: #{tpu_custom_call.1} parent=0
    _
  %s5 = ssub.s32 1, %s3
  %s6 = scalar_select 0, %s5, %s3
  $region1: #{tpu_custom_call.1} parent=0
    #allocation3 [shape = 'u8[512]{0}', space=vmem, size = 0x400, scoped, tag = 'output window, operand 0, single buffered']
    #allocation4 [shape = 's32[1]{0}', space=sflag, size = 0x4, scoped, tag = 'scoped memory for tpu_custom_call.1']
    %7 = vsyncpa [#allocation4], 0
    // Predicated region
    $region2: #{tpu_custom_call.1} parent=1 // pred_check
      _
    $region3: #{tpu_custom_call.1} parent=1 // pred_check_branch
      %9 = sbr.rel (0) target = $region5
    $region4: #{tpu_custom_call.1} parent=1 // pred_region
      _
    $region5: #{tpu_custom_call.1} parent=1 // pred_fallthru
      _
    // Predicated region
    $region6: #{tpu_custom_call.1} parent=1 // pred_check
      _
    $region7: #{tpu_custom_call.1} parent=1 // pred_check_branch
      %11 = sbr.rel (0) target = $region9
    $region8: #{tpu_custom_call.1} parent=1 // pred_region
      _
    $region9: #{tpu_custom_call.1} parent=1 // pred_fallthru
      _
    %p12 = scmp.eq.s32.totalorder 0, 0
    // Predicated region
    $region10: #{tpu_custom_call.1} parent=1 // pred_check
      %p13 = pneg %p12
    $region11: #{tpu_custom_call.1} parent=1 // pred_check_branch
      %15 = sbr.rel (%p13) target = $region13
    $region12: #{tpu_custom_call.1} parent=1 // pred_region
      %vm16 = vcmask 0
      %17 = vst.msk [vmem:[#allocation2] sm:$0x1] %vm16, 0.0
    $region13: #{tpu_custom_call.1} parent=1 // pred_fallthru
      _
    %v18 = vld [vmem:[%s0] sm:$0xff]
    %v19 = vld [vmem:[%s0 + $0x8] sm:$0xff]
    %vm20 = vcmask 261120
    %v21 = vsel %vm20, %v18, -inf
    %22 = vmax.xlane.f32.xlu0 %v21
    %v23 = vpop.xlane.xlu0 %22
    %v24 = vsel %vm20, %v19, -inf
    %25 = vmax.xlane.f32.xlu0 %v24
    %v26 = vpop.xlane.xlu0 %25
    %v27 = vsub.f32 %v18, %v23
    %v28 = vsub.f32 %v19, %v26
    %v29 = vmul.f32 %v27, 1.442695
    %v30 = vpow.pop %v29
    %v31 = vmul.f32 %v28, 1.442695
    %v32 = vpow.pop %v31
    %v33 = vsel %vm20, %v30, 0.0
    %34 = vadd.xlane.f32.xlu0 %v33
    %v35 = vpop.xlane.xlu0 %34
    %v36 = vsel %vm20, %v32, 0.0
    %37 = vadd.xlane.f32.xlu0 %v36
    %v38 = vpop.xlane.xlu0 %37
    %v39 = vlaneseq
    %v40 = vand.u32 %v39, 127
    %v41 = vld [vmem:[%s1] sm:$0xff]
    %v42 = vld [vmem:[%s1 + $0x8] sm:$0xff]
    %43 = vset.pattern.permute.xlu0 0
    %44 = vperm.xlu0 %43, %v41
    %v45 = vpop.permute.xlu0 %44
    %46 = vset.pattern.permute.xlu0 0
    %47 = vperm.xlu0 %46, %v42
    %v48 = vpop.permute.xlu0 %47
    %vm49 = vcmp.eq.s32.totalorder %v40, %v45
    %vm50 = vcmp.eq.s32.totalorder %v40, %v48
    %v51 = vsel %vm49, %v27, 0.0
    %v52 = vsel %vm50, %v28, 0.0
    %v53 = vsel %vm20, %v51, 0.0
    %54 = vadd.xlane.f32.xlu0 %v53
    %v55 = vpop.xlane.xlu0 %54
    %v56 = vsel %vm20, %v52, 0.0
    %57 = vadd.xlane.f32.xlu0 %v56
    %v58 = vpop.xlane.xlu0 %57
    %v59 = vlog2.pop %v35
    %v60 = vmul.f32 %v59, 0.6931472
    %v61 = vlog2.pop %v38
    %v62 = vmul.f32 %v61, 0.6931472
    %v63 = vsub.f32 %v55, %v60
    %v64 = vsub.f32 %v58, %v62
    %v65 = vmul.f32 %v63, 1.442695
    %v66 = vpow.pop %v65
    %v67 = vmul.f32 %v64, 1.442695
    %v68 = vpow.pop %v67
    %v69 = vsub.f32 1.0, %v66
    %v70 = vsub.f32 1.0, %v68
    %v71 = vmul.f32 %v69, %v69
    %v72 = vmul.f32 %v70, %v70
    %v73 = vmul.f32 %v71, %v63
    %v74 = vmul.f32 %v72, %v64
    %v75 = vsub.f32 0.0, %v73
    %v76 = vsub.f32 0.0, %v74
    %s77 = smul.u32 0, 16
    %v78 = vlaneseq
    %v79 = vshrl.u32 %v78, 7
    %v80 = vadd.s32 %v79, 8
    %v81 = vstv %s77
    %v82 = vadd.s32 %v81, %v79
    %v83 = vadd.s32 %v81, %v80
    %vm84 = vcmp.lt.s32.totalorder %v82, 16
    %vm85 = vcmp.lt.s32.totalorder %v83, 16
    %v86 = vsel %vm84, %v75, 0.0
    %v87 = vsel %vm85, %v76, 0.0
    %v88 = vld [vmem:[#allocation2] sm:$0x1]
    %vm89 = vcmask 7168
    %v90 = vsel %vm89, %v86, 0.0
    %v91 = vsel %vm89, %v87, 0.0
    %v92 = vadd.f32 %v90, %v91
    %93 = vadd.xlane.f32.xlu0 %v92
    %v94 = vpop.xlane.xlu0 %93
    %v95 = vrot.slane %v94, 4
    %v96 = vadd.f32 %v94, %v95
    %v97 = vrot.slane %v96, 2
    %v98 = vadd.f32 %v96, %v97
    %v99 = vrot.slane %v98, 1
    %v100 = vadd.f32 %v98, %v99
    %s101 = vtos %v100
    %v102 = vstv %s101
    %v103 = vadd.f32 %v88, %v102
    %vm104 = vcmask 0
    %105 = vst.msk [vmem:[#allocation2] sm:$0x1] %vm104, %v103
    // Predicated region
    $region14: #{tpu_custom_call.1} parent=1 // pred_check
      %p106 = pneg %p12
    $region15: #{tpu_custom_call.1} parent=1 // pred_check_branch
      %108 = sbr.rel (%p106) target = $region17
    $region16: #{tpu_custom_call.1} parent=1 // pred_region
      %v109 = vld [vmem:[#allocation2] sm:$0x1]
      %v110 = vmul.f32 %v109, 0.0625
      %111 = vst.msk [vmem:[#allocation3] sm:$0x1] %vm104, %v110
    $region17: #{tpu_custom_call.1} parent=1 // pred_fallthru
      _
    // Predicated region
    $region18: #{tpu_custom_call.1} parent=1 // pred_check
      _
    $region19: #{tpu_custom_call.1} parent=1 // pred_check_branch
      %113 = sbr.rel (0) target = $region21
    $region20: #{tpu_custom_call.1} parent=1 // pred_region
      %115 = vsyncadd [#allocation4], 0
      %s117 = sshll.u32 [#allocation3], 4
      %s118 = int_to_ptr.vmem [resolvable:$true] %s117
      %s119 = sshll.u32 %s2, 4
      %s120 = int_to_ptr.hbm [resolvable:$true] %s119
      %122 = dma.vmem_to_hbm [thread:$0]  %s118, 16, %s120, [#allocation4]
    $region21: #{tpu_custom_call.1} parent=1 // pred_fallthru
      _
    // Predicated region
    $region22: #{tpu_custom_call.1} parent=1 // pred_check
      _
    $region23: #{tpu_custom_call.1} parent=1 // pred_check_branch
      %124 = sbr.rel (0) target = $region25
    $region24: #{tpu_custom_call.1} parent=1 // pred_region
      %126 = dma.done [#allocation4], 16
    $region25: #{tpu_custom_call.1} parent=1 // pred_fallthru
      _
    %127 = vsyncpa [#allocation4], 1

</llo_original>
